<compile_context>
chip_gen: v7x
topology: tpu7x:2x2x1
jax: 0.10.0
libtpu: 0.0.40
codegen_flags: <defaults>
</compile_context>

<pallas_src>
import functools

import jax
import jax.numpy as jnp
from jax.experimental import pallas as pl
from jax.experimental.pallas import tpu as pltpu


def _round_up(v, m):
    return ((v + m - 1) // m) * m


def _mlp_kernel(x_ref, w1_ref, b1_ref, w2_ref, b2_ref, w3_ref, b3_ref, o_ref):
    """Fused relu(relu(relu(x@W1+b1)@W2+b2)@W3+b3) on one batch tile.

    Weights arrive pre-transposed ([in, out]) and zero-padded in bf16; the
    three dots accumulate in f32, bias-add + ReLU run in f32 on the VPU.
    """
    x = x_ref[...].astype(jnp.bfloat16)                          # (TB, nx)
    h1 = jnp.dot(x, w1_ref[...], preferred_element_type=jnp.float32)
    h1 = jnp.maximum(h1 + b1_ref[...], 0.0)                      # f32 (TB, Hp)
    h2 = jnp.dot(h1.astype(jnp.bfloat16), w2_ref[...],
                 preferred_element_type=jnp.float32)
    h2 = jnp.maximum(h2 + b2_ref[...], 0.0)                      # f32 (TB, Hp)
    out = jnp.dot(h2.astype(jnp.bfloat16), w3_ref[...],
                  preferred_element_type=jnp.float32)
    out = jnp.maximum(out + b3_ref[...], 0.0)                    # f32 (TB, NYp)
    o_ref[...] = out.astype(o_ref.dtype)


def prepare_simp_ann_params(w1, b1, w2, b2, w3, b3):
    """One-time parameter prep (hoisted out of the per-call path).

    PyTorch nn.Linear layout in: w [out, in], b [out].
    Returns weights transposed to [in, out], zero-padded to lane-multiples of
    128 on hidden/output dims, cast to bf16; biases zero-padded in f32.
    """
    hidden, nx = w1.shape
    ny = w3.shape[0]
    Hp = _round_up(max(hidden, 1), 128)
    NYp = _round_up(max(ny, 1), 128)

    w1p = jnp.zeros((nx, Hp), jnp.bfloat16).at[:, :hidden].set(
        w1.T.astype(jnp.bfloat16))
    w2p = jnp.zeros((Hp, Hp), jnp.bfloat16).at[:hidden, :hidden].set(
        w2.T.astype(jnp.bfloat16))
    w3p = jnp.zeros((Hp, NYp), jnp.bfloat16).at[:hidden, :ny].set(
        w3.T.astype(jnp.bfloat16))
    b1p = jnp.zeros((1, Hp), jnp.float32).at[0, :hidden].set(b1.astype(jnp.float32))
    b2p = jnp.zeros((1, Hp), jnp.float32).at[0, :hidden].set(b2.astype(jnp.float32))
    b3p = jnp.zeros((1, NYp), jnp.float32).at[0, :ny].set(b3.astype(jnp.float32))
    return dict(w1p=w1p, b1p=b1p, w2p=w2p, b2p=b2p, w3p=w3p, b3p=b3p, ny=ny)


def _pick_tb(batch):
    """Batch-tile size: big tiles for big B (amortize ~0.35us/grid-step),
    but >= 2 sublane-aligned tiles for small B so v7x's 2nd TC has work."""
    if batch >= 512:
        return 256
    if batch > 128:
        return 128
    return max(8, _round_up(_round_up(batch, 8) // 2, 8))


@functools.partial(jax.jit, static_argnames=("ny", "tb"))
def _simp_ann_forward_padded(xb, w1p, b1p, w2p, b2p, w3p, b3p, *, ny, tb):
    B, nx = xb.shape
    Hp = w2p.shape[0]
    NYp = w3p.shape[1]
    Bp = _round_up(max(B, 1), tb)

    # Pad only the batch axis (cheap); never pad x along nx.
    if Bp != B:
        xb = jnp.pad(xb, ((0, Bp - B), (0, 0)))

    n_tiles = Bp // tb

    weight_bytes = 2 * (nx * Hp + Hp * Hp + Hp * NYp)        # bf16 weights
    bias_bytes = 4 * (2 * Hp + NYp)                          # f32 biases
    flops = 2 * Bp * (nx * Hp + Hp * Hp + Hp * NYp)
    bytes_accessed = 4 * Bp * nx + 4 * Bp * NYp + weight_bytes + bias_bytes

    # Single-buffer the resident (constant index_map) weights/biases when they
    # are big enough that double-buffering would waste meaningful VMEM.
    resident = ({"pipeline_mode": pl.Buffered(1)}
                if weight_bytes > (4 << 20) else {})

    # Explicit VMEM budget: resident weights + biases + double-buffered x/out
    # tiles + activation headroom, clamped to v7x's 64 MiB per-TC VMEM.
    vmem_need = (weight_bytes + bias_bytes
                 + 2 * 4 * tb * (nx + NYp)
                 + 4 * 4 * tb * Hp)
    vmem_limit = int(min(64 * 1024 * 1024, max(16 * 1024 * 1024, 2 * vmem_need)))

    out_p = pl.pallas_call(
        _mlp_kernel,
        out_shape=jax.ShapeDtypeStruct((Bp, NYp), jnp.float32),
        grid_spec=pltpu.PrefetchScalarGridSpec(
            num_scalar_prefetch=0,
            grid=(n_tiles,),
            in_specs=[
                pl.BlockSpec((tb, nx), lambda i: (i, 0)),               # x tile
                pl.BlockSpec((nx, Hp), lambda i: (0, 0), **resident),   # W1
                pl.BlockSpec((1, Hp), lambda i: (0, 0), **resident),    # b1
                pl.BlockSpec((Hp, Hp), lambda i: (0, 0), **resident),   # W2
                pl.BlockSpec((1, Hp), lambda i: (0, 0), **resident),    # b2
                pl.BlockSpec((Hp, NYp), lambda i: (0, 0), **resident),  # W3
                pl.BlockSpec((1, NYp), lambda i: (0, 0), **resident),   # b3
            ],
            out_specs=pl.BlockSpec((tb, NYp), lambda i: (i, 0)),
        ),
        compiler_params=pltpu.CompilerParams(
            dimension_semantics=("parallel",),      # batch tiles -> both v7x TCs
            vmem_limit_bytes=vmem_limit,
        ),
        cost_estimate=pl.CostEstimate(
            flops=flops, transcendentals=0, bytes_accessed=bytes_accessed),
    )(xb, w1p, b1p, w2p, b2p, w3p, b3p)

    return out_p[:B, :ny]


def simp_ann_forward(x, params):
    """SimpAnn.forward: x [..., nx] -> [..., ny] via the fused Pallas MLP."""
    orig_shape = x.shape
    xb = x.astype(jnp.float32).reshape(-1, orig_shape[-1])
    tb = _pick_tb(xb.shape[0])
    out = _simp_ann_forward_padded(
        xb, params["w1p"], params["b1p"], params["w2p"], params["b2p"],
        params["w3p"], params["b3p"], ny=params["ny"], tb=tb)
    return out.reshape(orig_shape[:-1] + (params["ny"],))


def simp_ann_reference(x, w1, b1, w2, b2, w3, b3):
    """Pure-JAX f32 reference mirroring the PyTorch forward."""
    x = x.astype(jnp.float32)
    h1 = jax.nn.relu(x @ w1.T + b1)
    h2 = jax.nn.relu(h1 @ w2.T + b2)
    return jax.nn.relu(h2 @ w3.T + b3)


if __name__ == "__main__":
    # small shapes consistent with the module
    batch, seq, nx, hidden, ny = 2, 8, 16, 32, 4

    key = jax.random.PRNGKey(0)
    kx, k1, k2, k3, kb1, kb2, kb3 = jax.random.split(key, 7)
    x = jax.random.normal(kx, (batch, seq, nx), jnp.float32)

    # PyTorch nn.Linear layout: weight [out_features, in_features]
    w1 = jax.random.normal(k1, (hidden, nx), jnp.float32) * (1.0 / jnp.sqrt(nx))
    b1 = jax.random.normal(kb1, (hidden,), jnp.float32) * 0.1
    w2 = jax.random.normal(k2, (hidden, hidden), jnp.float32) * (1.0 / jnp.sqrt(hidden))
    b2 = jax.random.normal(kb2, (hidden,), jnp.float32) * 0.1
    w3 = jax.random.normal(k3, (ny, hidden), jnp.float32) * (1.0 / jnp.sqrt(hidden))
    b3 = jax.random.normal(kb3, (ny,), jnp.float32) * 0.1

    # one-time parameter prep (hoisted out of the per-call hot path)
    params = prepare_simp_ann_params(w1, b1, w2, b2, w3, b3)

    out = jax.block_until_ready(simp_ann_forward(x, params))
    ref = jax.block_until_ready(simp_ann_reference(x, w1, b1, w2, b2, w3, b3))

    assert out.shape == (batch, seq, ny), out.shape
    # bf16 MXU feed (f32 accumulation) -> slightly relaxed tolerance vs f32 ref
    assert bool(jnp.allclose(out, ref, rtol=3e-2, atol=3e-2)), "mismatch vs reference"

    print("KERNEL_OK")
</pallas_src>

<mosaic_0001>
module attributes {stable_mosaic.version = 11 : i64} {
  func.func @_mlp_kernel(%arg0: i32, %arg1: memref<8x16xf32, #tpu.memory_space<vmem>>, %arg2: memref<16x128xbf16, #tpu.memory_space<vmem>>, %arg3: memref<1x128xf32, #tpu.memory_space<vmem>>, %arg4: memref<128x128xbf16, #tpu.memory_space<vmem>>, %arg5: memref<1x128xf32, #tpu.memory_space<vmem>>, %arg6: memref<128x128xbf16, #tpu.memory_space<vmem>>, %arg7: memref<1x128xf32, #tpu.memory_space<vmem>>, %arg8: memref<8x128xf32, #tpu.memory_space<vmem>>) attributes {dimension_semantics = [#tpu.dimension_semantics<parallel>], iteration_bounds = array<i64: 2>, scalar_prefetch = 0 : i64, scratch_operands = 0 : i64, tpu.core_type = #tpu.core_type<tc>, window_params = [{transform_indices = @transform_0, window_bounds = array<i64: 8, 16>}, {pipeline_mode = #tpu.pipeline_mode<synchronous>, transform_indices = @transform_1, window_bounds = array<i64: 16, 128>}, {pipeline_mode = #tpu.pipeline_mode<synchronous>, transform_indices = @transform_2, window_bounds = array<i64: 1, 128>}, {pipeline_mode = #tpu.pipeline_mode<synchronous>, transform_indices = @transform_3, window_bounds = array<i64: 128, 128>}, {pipeline_mode = #tpu.pipeline_mode<synchronous>, transform_indices = @transform_4, window_bounds = array<i64: 1, 128>}, {pipeline_mode = #tpu.pipeline_mode<synchronous>, transform_indices = @transform_5, window_bounds = array<i64: 128, 128>}, {pipeline_mode = #tpu.pipeline_mode<synchronous>, transform_indices = @transform_6, window_bounds = array<i64: 1, 128>}, {transform_indices = @transform_7, window_bounds = array<i64: 8, 128>}]} {
    %c0 = arith.constant 0 : index
    %c0_0 = arith.constant 0 : index
    %0 = vector.load %arg1[%c0, %c0_0] : memref<8x16xf32, #tpu.memory_space<vmem>>, vector<8x16xf32>
    %1 = arith.truncf %0 : vector<8x16xf32> to vector<8x16xbf16>
    %c0_1 = arith.constant 0 : index
    %c0_2 = arith.constant 0 : index
    %2 = vector.load %arg2[%c0_1, %c0_2] : memref<16x128xbf16, #tpu.memory_space<vmem>>, vector<16x128xbf16>
    %cst = arith.constant dense<0.000000e+00> : vector<8x128xf32>
    %3 = tpu.matmul %1, %2, %cst {dimension_numbers = #tpu.dot_dimension_numbers<[1], [0], [0], [1], [0, 0, 1, 1], [], []>} : vector<8x16xbf16>, vector<16x128xbf16>, vector<8x128xf32> -> vector<8x128xf32>
    %c0_3 = arith.constant 0 : index
    %c0_4 = arith.constant 0 : index
    %4 = vector.load %arg3[%c0_3, %c0_4] : memref<1x128xf32, #tpu.memory_space<vmem>>, vector<1x128xf32>
    %5 = vector.broadcast %4 : vector<1x128xf32> to vector<8x128xf32>
    %6 = arith.addf %3, %5 : vector<8x128xf32>
    %cst_5 = arith.constant 0.000000e+00 : f32
    %7 = vector.broadcast %cst_5 : f32 to vector<8x128xf32>
    %8 = arith.maximumf %6, %7 : vector<8x128xf32>
    %9 = arith.truncf %8 : vector<8x128xf32> to vector<8x128xbf16>
    %c0_6 = arith.constant 0 : index
    %c0_7 = arith.constant 0 : index
    %10 = vector.load %arg4[%c0_6, %c0_7] : memref<128x128xbf16, #tpu.memory_space<vmem>>, vector<128x128xbf16>
    %cst_8 = arith.constant dense<0.000000e+00> : vector<8x128xf32>
    %11 = tpu.matmul %9, %10, %cst_8 {dimension_numbers = #tpu.dot_dimension_numbers<[1], [0], [0], [1], [0, 0, 1, 1], [], []>} : vector<8x128xbf16>, vector<128x128xbf16>, vector<8x128xf32> -> vector<8x128xf32>
    %c0_9 = arith.constant 0 : index
    %c0_10 = arith.constant 0 : index
    %12 = vector.load %arg5[%c0_9, %c0_10] : memref<1x128xf32, #tpu.memory_space<vmem>>, vector<1x128xf32>
    %13 = vector.broadcast %12 : vector<1x128xf32> to vector<8x128xf32>
    %14 = arith.addf %11, %13 : vector<8x128xf32>
    %cst_11 = arith.constant 0.000000e+00 : f32
    %15 = vector.broadcast %cst_11 : f32 to vector<8x128xf32>
    %16 = arith.maximumf %14, %15 : vector<8x128xf32>
    %17 = arith.truncf %16 : vector<8x128xf32> to vector<8x128xbf16>
    %c0_12 = arith.constant 0 : index
    %c0_13 = arith.constant 0 : index
    %18 = vector.load %arg6[%c0_12, %c0_13] : memref<128x128xbf16, #tpu.memory_space<vmem>>, vector<128x128xbf16>
    %cst_14 = arith.constant dense<0.000000e+00> : vector<8x128xf32>
    %19 = tpu.matmul %17, %18, %cst_14 {dimension_numbers = #tpu.dot_dimension_numbers<[1], [0], [0], [1], [0, 0, 1, 1], [], []>} : vector<8x128xbf16>, vector<128x128xbf16>, vector<8x128xf32> -> vector<8x128xf32>
    %c0_15 = arith.constant 0 : index
    %c0_16 = arith.constant 0 : index
    %20 = vector.load %arg7[%c0_15, %c0_16] : memref<1x128xf32, #tpu.memory_space<vmem>>, vector<1x128xf32>
    %21 = vector.broadcast %20 : vector<1x128xf32> to vector<8x128xf32>
    %22 = arith.addf %19, %21 : vector<8x128xf32>
    %cst_17 = arith.constant 0.000000e+00 : f32
    %23 = vector.broadcast %cst_17 : f32 to vector<8x128xf32>
    %24 = arith.maximumf %22, %23 : vector<8x128xf32>
    %c0_18 = arith.constant 0 : index
    %c0_19 = arith.constant 0 : index
    %25 = vector.load %arg8[%c0_18, %c0_19] : memref<8x128xf32, #tpu.memory_space<vmem>>, vector<8x128xf32>
    tpu.vector_store %arg8[%c0_18, %c0_19], %24 {strides = array<i32>} : memref<8x128xf32, #tpu.memory_space<vmem>>, vector<8x128xf32>,
    return
  }
  func.func @transform_0(%arg0: i32) -> (i32, i32) {
    %c0_i32 = arith.constant 0 : i32
    %c0_i32_0 = arith.constant 0 : i32
    return %arg0, %c0_i32 : i32, i32
  }
  func.func @transform_1(%arg0: i32) -> (i32, i32) {
    %c0_i32 = arith.constant 0 : i32
    %c0_i32_0 = arith.constant 0 : i32
    %c0_i32_1 = arith.constant 0 : i32
    return %c0_i32, %c0_i32_0 : i32, i32
  }
  func.func @transform_2(%arg0: i32) -> (i32, i32) {
    %c0_i32 = arith.constant 0 : i32
    %c0_i32_0 = arith.constant 0 : i32
    %c0_i32_1 = arith.constant 0 : i32
    return %c0_i32, %c0_i32_0 : i32, i32
  }
  func.func @transform_3(%arg0: i32) -> (i32, i32) {
    %c0_i32 = arith.constant 0 : i32
    %c0_i32_0 = arith.constant 0 : i32
    %c0_i32_1 = arith.constant 0 : i32
    return %c0_i32, %c0_i32_0 : i32, i32
  }
  func.func @transform_4(%arg0: i32) -> (i32, i32) {
    %c0_i32 = arith.constant 0 : i32
    %c0_i32_0 = arith.constant 0 : i32
    %c0_i32_1 = arith.constant 0 : i32
    return %c0_i32, %c0_i32_0 : i32, i32
  }
  func.func @transform_5(%arg0: i32) -> (i32, i32) {
    %c0_i32 = arith.constant 0 : i32
    %c0_i32_0 = arith.constant 0 : i32
    %c0_i32_1 = arith.constant 0 : i32
    return %c0_i32, %c0_i32_0 : i32, i32
  }
  func.func @transform_6(%arg0: i32) -> (i32, i32) {
    %c0_i32 = arith.constant 0 : i32
    %c0_i32_0 = arith.constant 0 : i32
    %c0_i32_1 = arith.constant 0 : i32
    return %c0_i32, %c0_i32_0 : i32, i32
  }
  func.func @transform_7(%arg0: i32) -> (i32, i32) {
    %c0_i32 = arith.constant 0 : i32
    %c0_i32_0 = arith.constant 0 : i32
    return %arg0, %c0_i32 : i32, i32
  }
}

</mosaic_0001>

<llo_original>
// kernel: _simp_ann_forward_padded.1
$region0: #{_simp_ann_forward_padded.1}
  #allocation0 [shape = 'u32[]', space=smem, size = 0x4, offset = 0x4, fixed_abs, tag = 'smem constant byte address 0x4 - core index']
  #allocation1 [shape = 'u32[144,128]{1,0:T(1,128)}', space=vmem, size = 0x12000, scoped, tag = 'internal scratch']
  %s0 = inlined_call_operand.hbm [shape: f32[16,16], index: 0, kind: input, shape index: {}]
  %s1 = inlined_call_operand.hbm [shape: bf16[16,128], index: 1, kind: input, shape index: {}]
  %s2 = inlined_call_operand.vmem [shape: f32[1,128], index: 2, kind: input, shape index: {}]
  %s3 = inlined_call_operand.hbm [shape: bf16[128,128], index: 3, kind: input, shape index: {}]
  %s4 = inlined_call_operand.vmem [shape: f32[1,128], index: 4, kind: input, shape index: {}]
  %s5 = inlined_call_operand.hbm [shape: bf16[128,128], index: 5, kind: input, shape index: {}]
  %s6 = inlined_call_operand.vmem [shape: f32[1,128], index: 6, kind: input, shape index: {}]
  %s7 = inlined_call_operand.vmem [shape: f32[16,128], index: 7, kind: output, shape index: {}]
  %s8 = sld [smem:[#allocation0]]
  $region77: #{_simp_ann_forward_padded.1} parent=0
    _
  %s10 = ssub.s32 1, %s8
  %s11 = scalar_select 0, %s10, %s8
  $region1: #{_simp_ann_forward_padded.1} parent=0
    #allocation2 [shape = 'u8[8192]{0}', space=vmem, size = 0x2000, scoped, tag = 'input window, operand 0']
    #allocation3 [shape = 's32[2]{0}', space=sflag, size = 0x8, scoped, tag = 'scoped memory for _simp_ann_forward_padded.1']
    #allocation4 [shape = 'u8[4096]{0}', space=vmem, size = 0x1000, scoped, tag = 'input window, operand 1, single buffered']
    #allocation5 [shape = 's32[1]{0}', space=sflag, size = 0x4, scoped, tag = 'scoped memory for _simp_ann_forward_padded.1']
    #allocation6 [shape = 'u8[32768]{0}', space=vmem, size = 0x8000, scoped, tag = 'input window, operand 3, single buffered']
    #allocation7 [shape = 'u8[32768]{0}', space=vmem, size = 0x8000, scoped, tag = 'input window, operand 5, single buffered']
    #allocation8 [shape = 's32[1]{0}', space=sflag, size = 0x4, scoped, tag = 'scoped memory for _simp_ann_forward_padded.1']
    %12 = vsyncpa [#allocation3], 0
    %s13 = scalar_lea.sflag [#allocation3], 1
    %14 = vsyncpa %s13, 0
    %15 = vsyncpa [#allocation5], 0
    %16 = vsyncpa [#allocation8], 0
    loop: start=0, step=1, limit=4
    $region2: #{_simp_ann_forward_padded.1} parent=1 // loop_pre_header
      _
    $region3: #{_simp_ann_forward_padded.1} parent=1 // loop_header
      %s18 = sphi 0, %s22
      %p19 = scmp.ge.s32.totalorder %s18, 4
      %s28 = sphi 0, %s30
      %s31 = sphi 0, %s28
      %s32 = sphi 0, %s31
      %s48 = sphi 0, %s32
      %s52 = sphi 0, %s52
      %s54 = sphi 0, %s52
      %s55 = sphi 0, %s54
      %s69 = sphi 0, %s55
      %s73 = sphi 0, %s73
      %s75 = sphi 0, %s73
      %s76 = sphi 0, %s75
      %s90 = sphi 0, %s76
      %s94 = sphi 0, %s94
      %s96 = sphi 0, %s94
      %s97 = sphi 0, %s96
      %s111 = sphi 0, %s97
      %s115 = sphi 0, %s115
      %s117 = sphi 0, %s115
      %s118 = sphi 0, %s117
      %s132 = sphi 0, %s118
      %s136 = sphi 0, %s136
      %s138 = sphi 0, %s136
      %s139 = sphi 0, %s138
      %s153 = sphi 0, %s139
      %s157 = sphi 0, %s157
      %s159 = sphi 0, %s157
      %s160 = sphi 0, %s159
      %s174 = sphi 0, %s160
      %s180 = sphi 0, %s182
      %s183 = sphi 0, %s180
      %s184 = sphi 0, %s183
      %s200 = sphi 0, %s184
    $region4: #{_simp_ann_forward_padded.1} parent=1 // loop_header_branch
      %21 = sbr.rel (%p19) target = $region8
    $region5: #{_simp_ann_forward_padded.1} parent=1 // loop_body
      %s23 = ssub.s32 %s18, 1
      %s24 = ssub.s32 %s18, 2
      %s25 = sadd.s32 %s18, 1
      %s26 = ssub.s32 %s18, %s25
      %p27 = scmp.eq.s32.totalorder %s26, 0
      %s29 = sadd.s32 %s28, 1
      %s30 = scalar_select %p27, %s28, %s29
      %p33 = pneg %p27
      %p34 = scmp.eq.s32.totalorder %s18, 1
      %p35 = por %p33, %p34
      %p36 = scmp.ne.s32.totalorder %s28, %s31
      %p37 = scmp.eq.s32.totalorder %s18, 0
      %p38 = por %p36, %p37
      %p39 = scmp.ne.s32.totalorder %s28, %s31
      %p40 = scmp.eq.s32.totalorder %s23, 1
      %p41 = por %p39, %p40
      %p42 = scmp.ne.s32.totalorder %s31, %s32
      %p43 = scmp.eq.s32.totalorder %s23, 0
      %p44 = por %p42, %p43
      %p45 = scmp.ne.s32.totalorder %s31, %s32
      %p46 = scmp.eq.s32.totalorder %s24, 1
      %p47 = por %p45, %p46
      %p49 = scmp.ne.s32.totalorder %s32, %s48
      %p50 = scmp.eq.s32.totalorder %s24, 0
      %p51 = por %p49, %p50
      %s53 = sadd.s32 %s52, 1
      %p56 = scmp.eq.s32.totalorder %s18, 1
      %p57 = scmp.ne.s32.totalorder %s52, %s54
      %p58 = scmp.eq.s32.totalorder %s18, 0
      %p59 = por %p57, %p58
      %p60 = scmp.ne.s32.totalorder %s52, %s54
      %p61 = scmp.eq.s32.totalorder %s23, 1
      %p62 = por %p60, %p61
      %p63 = scmp.ne.s32.totalorder %s54, %s55
      %p64 = scmp.eq.s32.totalorder %s23, 0
      %p65 = por %p63, %p64
      %p66 = scmp.ne.s32.totalorder %s54, %s55
      %p67 = scmp.eq.s32.totalorder %s24, 1
      %p68 = por %p66, %p67
      %p70 = scmp.ne.s32.totalorder %s55, %s69
      %p71 = scmp.eq.s32.totalorder %s24, 0
      %p72 = por %p70, %p71
      %s74 = sadd.s32 %s73, 1
      %p77 = scmp.eq.s32.totalorder %s18, 1
      %p78 = scmp.ne.s32.totalorder %s73, %s75
      %p79 = scmp.eq.s32.totalorder %s18, 0
      %p80 = por %p78, %p79
      %p81 = scmp.ne.s32.totalorder %s73, %s75
      %p82 = scmp.eq.s32.totalorder %s23, 1
      %p83 = por %p81, %p82
      %p84 = scmp.ne.s32.totalorder %s75, %s76
      %p85 = scmp.eq.s32.totalorder %s23, 0
      %p86 = por %p84, %p85
      %p87 = scmp.ne.s32.totalorder %s75, %s76
      %p88 = scmp.eq.s32.totalorder %s24, 1
      %p89 = por %p87, %p88
      %p91 = scmp.ne.s32.totalorder %s76, %s90
      %p92 = scmp.eq.s32.totalorder %s24, 0
      %p93 = por %p91, %p92
      %s95 = sadd.s32 %s94, 1
      %p98 = scmp.eq.s32.totalorder %s18, 1
      %p99 = scmp.ne.s32.totalorder %s94, %s96
      %p100 = scmp.eq.s32.totalorder %s18, 0
      %p101 = por %p99, %p100
      %p102 = scmp.ne.s32.totalorder %s94, %s96
      %p103 = scmp.eq.s32.totalorder %s23, 1
      %p104 = por %p102, %p103
      %p105 = scmp.ne.s32.totalorder %s96, %s97
      %p106 = scmp.eq.s32.totalorder %s23, 0
      %p107 = por %p105, %p106
      %p108 = scmp.ne.s32.totalorder %s96, %s97
      %p109 = scmp.eq.s32.totalorder %s24, 1
      %p110 = por %p108, %p109
      %p112 = scmp.ne.s32.totalorder %s97, %s111
      %p113 = scmp.eq.s32.totalorder %s24, 0
      %p114 = por %p112, %p113
      %s116 = sadd.s32 %s115, 1
      %p119 = scmp.eq.s32.totalorder %s18, 1
      %p120 = scmp.ne.s32.totalorder %s115, %s117
      %p121 = scmp.eq.s32.totalorder %s18, 0
      %p122 = por %p120, %p121
      %p123 = scmp.ne.s32.totalorder %s115, %s117
      %p124 = scmp.eq.s32.totalorder %s23, 1
      %p125 = por %p123, %p124
      %p126 = scmp.ne.s32.totalorder %s117, %s118
      %p127 = scmp.eq.s32.totalorder %s23, 0
      %p128 = por %p126, %p127
      %p129 = scmp.ne.s32.totalorder %s117, %s118
      %p130 = scmp.eq.s32.totalorder %s24, 1
      %p131 = por %p129, %p130
      %p133 = scmp.ne.s32.totalorder %s118, %s132
      %p134 = scmp.eq.s32.totalorder %s24, 0
      %p135 = por %p133, %p134
      %s137 = sadd.s32 %s136, 1
      %p140 = scmp.eq.s32.totalorder %s18, 1
      %p141 = scmp.ne.s32.totalorder %s136, %s138
      %p142 = scmp.eq.s32.totalorder %s18, 0
      %p143 = por %p141, %p142
      %p144 = scmp.ne.s32.totalorder %s136, %s138
      %p145 = scmp.eq.s32.totalorder %s23, 1
      %p146 = por %p144, %p145
      %p147 = scmp.ne.s32.totalorder %s138, %s139
      %p148 = scmp.eq.s32.totalorder %s23, 0
      %p149 = por %p147, %p148
      %p150 = scmp.ne.s32.totalorder %s138, %s139
      %p151 = scmp.eq.s32.totalorder %s24, 1
      %p152 = por %p150, %p151
      %p154 = scmp.ne.s32.totalorder %s139, %s153
      %p155 = scmp.eq.s32.totalorder %s24, 0
      %p156 = por %p154, %p155
      %s158 = sadd.s32 %s157, 1
      %p161 = scmp.eq.s32.totalorder %s18, 1
      %p162 = scmp.ne.s32.totalorder %s157, %s159
      %p163 = scmp.eq.s32.totalorder %s18, 0
      %p164 = por %p162, %p163
      %p165 = scmp.ne.s32.totalorder %s157, %s159
      %p166 = scmp.eq.s32.totalorder %s23, 1
      %p167 = por %p165, %p166
      %p168 = scmp.ne.s32.totalorder %s159, %s160
      %p169 = scmp.eq.s32.totalorder %s23, 0
      %p170 = por %p168, %p169
      %p171 = scmp.ne.s32.totalorder %s159, %s160
      %p172 = scmp.eq.s32.totalorder %s24, 1
      %p173 = por %p171, %p172
      %p175 = scmp.ne.s32.totalorder %s160, %s174
      %p176 = scmp.eq.s32.totalorder %s24, 0
      %p177 = por %p175, %p176
      %s178 = ssub.s32 %s18, %s25
      %p179 = scmp.eq.s32.totalorder %s178, 0
      %s181 = sadd.s32 %s180, 1
      %s182 = scalar_select %p179, %s180, %s181
      %p185 = pneg %p179
      %p186 = scmp.eq.s32.totalorder %s18, 1
      %p187 = por %p185, %p186
      %p188 = scmp.ne.s32.totalorder %s180, %s183
      %p189 = scmp.eq.s32.totalorder %s18, 0
      %p190 = por %p188, %p189
      %p191 = scmp.ne.s32.totalorder %s180, %s183
      %p192 = scmp.eq.s32.totalorder %s23, 1
      %p193 = por %p191, %p192
      %p194 = scmp.ne.s32.totalorder %s183, %s184
      %p195 = scmp.eq.s32.totalorder %s23, 0
      %p196 = por %p194, %p195
      %p197 = scmp.ne.s32.totalorder %s183, %s184
      %p198 = scmp.eq.s32.totalorder %s24, 1
      %p199 = por %p197, %p198
      %p201 = scmp.ne.s32.totalorder %s184, %s200
      %p202 = scmp.eq.s32.totalorder %s24, 0
      %p203 = por %p201, %p202
      %p204 = scmp.le.s32.totalorder 1, %s18
      %p205 = scmp.lt.s32.totalorder %s18, 3
      %p206 = pnand %p204, %p205
      %p207 = pneg %p206
      // Predicated region
      $region9: #{_simp_ann_forward_padded.1} parent=5 // pred_check
        _
      $region10: #{_simp_ann_forward_padded.1} parent=5 // pred_check_branch
        %209 = sbr.rel (%p206) target = $region12
      $region11: #{_simp_ann_forward_padded.1} parent=5 // pred_region
        %s210 = ssub.s32 %s18, 1
        // Predicated region
        $region13: #{_simp_ann_forward_padded.1} parent=11 // pred_check
          %p211 = pneg %p65
        $region14: #{_simp_ann_forward_padded.1} parent=11 // pred_check_branch
          %213 = sbr.rel (%p211) target = $region16
        $region15: #{_simp_ann_forward_padded.1} parent=11 // pred_region
          %s215 = ssub.s32 128, 128
          %216 = vsyncadd [#allocation5], %s215
          %s217 = sshll.u32 [#allocation4], 4
          %s218 = int_to_ptr.vmem [resolvable:$true] %s217
          %223 = dma.hbm_to_vmem [thread:$0]  %s1, 128, %s218, [#allocation5], 64, 64, 4
        $region16: #{_simp_ann_forward_padded.1} parent=11 // pred_fallthru
          _
        // Predicated region
        $region17: #{_simp_ann_forward_padded.1} parent=11 // pred_check
          %p224 = pneg %p86
        $region18: #{_simp_ann_forward_padded.1} parent=11 // pred_check_branch
          %226 = sbr.rel (%p224) target = $region20
        $region19: #{_simp_ann_forward_padded.1} parent=11 // pred_region
          _
        $region20: #{_simp_ann_forward_padded.1} parent=11 // pred_fallthru
          _
        // Predicated region
        $region21: #{_simp_ann_forward_padded.1} parent=11 // pred_check
          %p227 = pneg %p107
        $region22: #{_simp_ann_forward_padded.1} parent=11 // pred_check_branch
          %229 = sbr.rel (%p227) target = $region24
        $region23: #{_simp_ann_forward_padded.1} parent=11 // pred_region
          %s231 = ssub.s32 1024, 1024
          %232 = vsyncadd [#allocation5], %s231
          %s233 = sshll.u32 [#allocation6], 4
          %s234 = int_to_ptr.vmem [resolvable:$true] %s233
          %239 = dma.hbm_to_vmem [thread:$0]  %s3, 1024, %s234, [#allocation5], 64, 64, 4
        $region24: #{_simp_ann_forward_padded.1} parent=11 // pred_fallthru
          _
        // Predicated region
        $region25: #{_simp_ann_forward_padded.1} parent=11 // pred_check
          %p240 = pneg %p128
        $region26: #{_simp_ann_forward_padded.1} parent=11 // pred_check_branch
          %242 = sbr.rel (%p240) target = $region28
        $region27: #{_simp_ann_forward_padded.1} parent=11 // pred_region
          _
        $region28: #{_simp_ann_forward_padded.1} parent=11 // pred_fallthru
          _
        // Predicated region
        $region29: #{_simp_ann_forward_padded.1} parent=11 // pred_check
          %p243 = pneg %p149
        $region30: #{_simp_ann_forward_padded.1} parent=11 // pred_check_branch
          %245 = sbr.rel (%p243) target = $region32
        $region31: #{_simp_ann_forward_padded.1} parent=11 // pred_region
          %s247 = ssub.s32 1024, 1024
          %248 = vsyncadd [#allocation8], %s247
          %s249 = sshll.u32 [#allocation7], 4
          %s250 = int_to_ptr.vmem [resolvable:$true] %s249
          %255 = dma.hbm_to_vmem [thread:$0]  %s5, 1024, %s250, [#allocation8], 64, 64, 4
        $region32: #{_simp_ann_forward_padded.1} parent=11 // pred_fallthru
          _
        // Predicated region
        $region33: #{_simp_ann_forward_padded.1} parent=11 // pred_check
          %p256 = pneg %p170
        $region34: #{_simp_ann_forward_padded.1} parent=11 // pred_check_branch
          %258 = sbr.rel (%p256) target = $region36
        $region35: #{_simp_ann_forward_padded.1} parent=11 // pred_region
          _
        $region36: #{_simp_ann_forward_padded.1} parent=11 // pred_fallthru
          _
      $region12: #{_simp_ann_forward_padded.1} parent=5 // pred_fallthru
        _
      %p259 = scmp.lt.s32.totalorder %s18, 2
      // Predicated region
      $region37: #{_simp_ann_forward_padded.1} parent=5 // pred_check
        %p260 = pneg %p259
      $region38: #{_simp_ann_forward_padded.1} parent=5 // pred_check_branch
        %262 = sbr.rel (%p260) target = $region40
      $region39: #{_simp_ann_forward_padded.1} parent=5 // pred_region
        // Predicated region
        $region41: #{_simp_ann_forward_padded.1} parent=39 // pred_check
          %p263 = pneg %p38
        $region42: #{_simp_ann_forward_padded.1} parent=39 // pred_check_branch
          %265 = sbr.rel (%p263) target = $region44
        $region43: #{_simp_ann_forward_padded.1} parent=39 // pred_region
          %s266 = sand.u32 %s28, 1
          %s267 = scalar_lea.sflag [#allocation3], %s266
          %s268 = sand.u32 %s28, 1
          %s269 = smul.addr %s268, 8
          %s270 = scalar_lea.vmem [#allocation2], %s269
          %s272 = ssub.s32 128, 128
          %273 = vsyncadd %s267, %s272
          %s274 = smul.addr %s18, 128
          %s275 = scalar_lea.hbm %s0, %s274
          %s277 = sshll.u32 %s270, 4
          %s278 = int_to_ptr.vmem [resolvable:$true] %s277
          %280 = dma.hbm_to_vmem [thread:$0]  %s275, 128, %s278, %s267
        $region44: #{_simp_ann_forward_padded.1} parent=39 // pred_fallthru
          _
      $region40: #{_simp_ann_forward_padded.1} parent=5 // pred_fallthru
        _
      %p281 = scmp.le.s32.totalorder 1, %s18
      %p282 = scmp.lt.s32.totalorder %s18, 3
      %p283 = pnand %p281, %p282
      %p284 = pneg %p283
      // Predicated region
      $region45: #{_simp_ann_forward_padded.1} parent=5 // pred_check
        _
      $region46: #{_simp_ann_forward_padded.1} parent=5 // pred_check_branch
        %286 = sbr.rel (%p283) target = $region48
      $region47: #{_simp_ann_forward_padded.1} parent=5 // pred_region
        %s287 = ssub.s32 %s18, 1
        %s288 = sand.u32 %s31, 1
        %s289 = scalar_lea.sflag [#allocation3], %s288
        %s290 = sand.u32 %s31, 1
        %s291 = smul.addr %s290, 8
        %s292 = scalar_lea.vmem [#allocation2], %s291
        // Predicated region
        $region49: #{_simp_ann_forward_padded.1} parent=47 // pred_check
          %p293 = pneg %p44
        $region50: #{_simp_ann_forward_padded.1} parent=47 // pred_check_branch
          %295 = sbr.rel (%p293) target = $region52
        $region51: #{_simp_ann_forward_padded.1} parent=47 // pred_region
          %296 = dma.done %s289, 128
        $region52: #{_simp_ann_forward_padded.1} parent=47 // pred_fallthru
          _
        // Predicated region
        $region53: #{_simp_ann_forward_padded.1} parent=47 // pred_check
          %p297 = pneg %p65
        $region54: #{_simp_ann_forward_padded.1} parent=47 // pred_check_branch
          %299 = sbr.rel (%p297) target = $region56
        $region55: #{_simp_ann_forward_padded.1} parent=47 // pred_region
          %300 = dma.done [#allocation5], 128
        $region56: #{_simp_ann_forward_padded.1} parent=47 // pred_fallthru
          _
        // Predicated region
        $region57: #{_simp_ann_forward_padded.1} parent=47 // pred_check
          %p301 = pneg %p107
        $region58: #{_simp_ann_forward_padded.1} parent=47 // pred_check_branch
          %303 = sbr.rel (%p301) target = $region60
        $region59: #{_simp_ann_forward_padded.1} parent=47 // pred_region
          %304 = dma.done [#allocation5], 1024
        $region60: #{_simp_ann_forward_padded.1} parent=47 // pred_fallthru
          _
        // Predicated region
        $region61: #{_simp_ann_forward_padded.1} parent=47 // pred_check
          %p305 = pneg %p149
        $region62: #{_simp_ann_forward_padded.1} parent=47 // pred_check_branch
          %307 = sbr.rel (%p305) target = $region64
        $region63: #{_simp_ann_forward_padded.1} parent=47 // pred_region
          %308 = dma.done [#allocation8], 1024
        $region64: #{_simp_ann_forward_padded.1} parent=47 // pred_fallthru
          _
        %s309 = sand.u32 %s31, 1
        %s310 = scalar_lea.sflag [#allocation3], %s309
        %s311 = sand.u32 %s31, 1
        %s312 = smul.addr %s311, 8
        %s313 = scalar_lea.vmem [#allocation2], %s312
        %p314 = pneg %p44
        %p315 = pneg %p41
        %p316 = pneg %p65
        %p317 = pneg %p62
        %p318 = pneg %p86
        %p319 = pneg %p83
        %p320 = pneg %p107
        %p321 = pneg %p104
        %p322 = pneg %p128
        %p323 = pneg %p125
        %p324 = pneg %p149
        %p325 = pneg %p146
        %p326 = pneg %p170
        %p327 = pneg %p167
        %p328 = pneg %p196
        %p329 = pneg %p193
        %p330 = scmp.lt.s32.totalorder %s23, 1
        %s331 = scalar_select %p330, %s23, 1
        %s332 = smul.addr %s331, 8
        %s333 = scalar_lea.vmem %s7, %s332
        %p334 = scmp.lt.s32.totalorder %s23, 1
        %s335 = scalar_select %p334, %s23, 1
        %s336 = smul.addr %s335, 8
        %s337 = scalar_lea.vmem %s7, %s336
        %v339 = vld [vmem:[%s292] sm:$0xff]
        %v340 = vpack.c.bf16 %v339, %v339
        %v341 = vld [vmem:[#allocation4] sm:$0xf]
        %v342 = vld [vmem:[#allocation4 + $0x4] sm:$0xf]
        %v343 = vld [vmem:[%s2] sm:$0x1]
        %v345 = vlaneseq
        %v346 = vshrl.u32 %v345, 7
        %v347 = vsub.s32 0, %v346
        %v348 = vrot.slane %v343, %v347
        %v352 = vunpack.c.l.b16 %v341
        %v353 = vunpack.c.l.b16 %v342
        %v354 = vpack.c.b16 %v353, %v352
        %vm356 = vcmask 130048
        %v358 = vsel %vm356, %v340, 0
        %360 = vmatprep.subr.bf16.mxu0 0
        %361 = vmatpush1.bf16.msra.mxu0 %v354
        %362 = vmatprep.subr.bf16.mxu0 0
        %363 = vmatpush1.bf16.msra.mxu0 0
        %364 = vmatprep.subr.bf16.mxu0 0
        %365 = vmatpush1.bf16.msra.mxu0 0
        %366 = vmatprep.subr.bf16.mxu0 0
        %367 = vmatpush1.bf16.msra.mxu0 0
        %368 = vmatprep.subr.bf16.mxu0 0
        %369 = vmatpush1.bf16.msra.mxu0 0
        %370 = vmatprep.subr.bf16.mxu0 0
        %371 = vmatpush1.bf16.msra.mxu0 0
        %372 = vmatprep.subr.bf16.mxu0 0
        %373 = vmatpush1.bf16.msra.mxu0 0
        %374 = vmatprep.subr.bf16.mxu0 0
        %375 = vmatpush1.bf16.msra.mxu0 0
        %376 = vmatprep.subr.bf16.mxu0 0
        %377 = vmatpush1.bf16.msra.mxu0 0
        %378 = vmatprep.subr.bf16.mxu0 0
        %379 = vmatpush1.bf16.msra.mxu0 0
        %380 = vmatprep.subr.bf16.mxu0 0
        %381 = vmatpush1.bf16.msra.mxu0 0
        %382 = vmatprep.subr.bf16.mxu0 0
        %383 = vmatpush1.bf16.msra.mxu0 0
        %384 = vmatprep.subr.bf16.mxu0 0
        %385 = vmatpush1.bf16.msra.mxu0 0
        %386 = vmatprep.subr.bf16.mxu0 0
        %387 = vmatpush1.bf16.msra.mxu0 0
        %388 = vmatprep.subr.bf16.mxu0 0
        %389 = vmatpush1.bf16.msra.mxu0 0
        %390 = vmatprep.subr.bf16.mxu0 0
        %391 = vmatpush1.bf16.msra.mxu0 0
        %392 = vmatprep.mubr.bf16.mxu0 0
        %393 = vmatmul.mubr.bf16.gmra.mrb[0].mxu0 %v358
        %v394 = vpop.f32.mrb[0].mxu0
        %v395 = vadd.f32 %v348, %v394
        %v396 = vpop.f32.mrb[0].mxu0
        %v397 = vpop.f32.mrb[0].mxu0
        %v398 = vpop.f32.mrb[0].mxu0
        %399 = vdwg.mxu0
        %v400 = vmax.f32 %v395, 0.0
        %v401 = vpack.c.bf16 %v400, %v400
        %v402 = vld [vmem:[#allocation6] sm:$0xf]
        %v403 = vld [vmem:[#allocation6 + $0x4] sm:$0xf]
        %v404 = vld [vmem:[#allocation6 + $0x8] sm:$0xf]
        %v405 = vld [vmem:[#allocation6 + $0xc] sm:$0xf]
        %v406 = vld [vmem:[#allocation6 + $0x10] sm:$0xf]
        %v407 = vld [vmem:[#allocation6 + $0x14] sm:$0xf]
        %v408 = vld [vmem:[#allocation6 + $0x18] sm:$0xf]
        %v409 = vld [vmem:[#allocation6 + $0x1c] sm:$0xf]
        %v410 = vld [vmem:[#allocation6 + $0x20] sm:$0xf]
        %v411 = vld [vmem:[#allocation6 + $0x24] sm:$0xf]
        %v412 = vld [vmem:[#allocation6 + $0x28] sm:$0xf]
        %v413 = vld [vmem:[#allocation6 + $0x2c] sm:$0xf]
        %v414 = vld [vmem:[#allocation6 + $0x30] sm:$0xf]
        %v415 = vld [vmem:[#allocation6 + $0x34] sm:$0xf]
        %v416 = vld [vmem:[#allocation6 + $0x38] sm:$0xf]
        %v417 = vld [vmem:[#allocation6 + $0x3c] sm:$0xf]
        %v418 = vld [vmem:[%s4] sm:$0x1]
        %v420 = vlaneseq
        %v421 = vshrl.u32 %v420, 7
        %v422 = vsub.s32 0, %v421
        %v423 = vrot.slane %v418, %v422
        %v441 = vunpack.c.l.b16 %v402
        %v442 = vunpack.c.l.b16 %v403
        %v443 = vunpack.c.l.b16 %v404
        %v444 = vunpack.c.l.b16 %v405
        %v445 = vunpack.c.l.b16 %v406
        %v446 = vunpack.c.l.b16 %v407
        %v447 = vunpack.c.l.b16 %v408
        %v448 = vunpack.c.l.b16 %v409
        %v449 = vunpack.c.l.b16 %v410
        %v450 = vunpack.c.l.b16 %v411
        %v451 = vunpack.c.l.b16 %v412
        %v452 = vunpack.c.l.b16 %v413
        %v453 = vunpack.c.l.b16 %v414
        %v454 = vunpack.c.l.b16 %v415
        %v455 = vunpack.c.l.b16 %v416
        %v456 = vunpack.c.l.b16 %v417
        %v457 = vpack.c.b16 %v442, %v441
        %v458 = vpack.c.b16 %v444, %v443
        %v459 = vpack.c.b16 %v446, %v445
        %v460 = vpack.c.b16 %v448, %v447
        %v461 = vpack.c.b16 %v450, %v449
        %v462 = vpack.c.b16 %v452, %v451
        %v463 = vpack.c.b16 %v454, %v453
        %v464 = vpack.c.b16 %v456, %v455
        %473 = vmatprep.subr.bf16.mxu0 0
        %474 = vmatpush1.bf16.msra.mxu0 %v457
        %475 = vmatprep.subr.bf16.mxu0 0
        %476 = vmatpush1.bf16.msra.mxu0 %v458
        %477 = vmatprep.subr.bf16.mxu0 0
        %478 = vmatpush1.bf16.msra.mxu0 %v459
        %479 = vmatprep.subr.bf16.mxu0 0
        %480 = vmatpush1.bf16.msra.mxu0 %v460
        %481 = vmatprep.subr.bf16.mxu0 0
        %482 = vmatpush1.bf16.msra.mxu0 %v461
        %483 = vmatprep.subr.bf16.mxu0 0
        %484 = vmatpush1.bf16.msra.mxu0 %v462
        %485 = vmatprep.subr.bf16.mxu0 0
        %486 = vmatpush1.bf16.msra.mxu0 %v463
        %487 = vmatprep.subr.bf16.mxu0 0
        %488 = vmatpush1.bf16.msra.mxu0 %v464
        %489 = vmatprep.subr.bf16.mxu0 0
        %490 = vmatpush1.bf16.msra.mxu0 0
        %491 = vmatprep.subr.bf16.mxu0 0
        %492 = vmatpush1.bf16.msra.mxu0 0
        %493 = vmatprep.subr.bf16.mxu0 0
        %494 = vmatpush1.bf16.msra.mxu0 0
        %495 = vmatprep.subr.bf16.mxu0 0
        %496 = vmatpush1.bf16.msra.mxu0 0
        %497 = vmatprep.subr.bf16.mxu0 0
        %498 = vmatpush1.bf16.msra.mxu0 0
        %499 = vmatprep.subr.bf16.mxu0 0
        %500 = vmatpush1.bf16.msra.mxu0 0
        %501 = vmatprep.subr.bf16.mxu0 0
        %502 = vmatpush1.bf16.msra.mxu0 0
        %503 = vmatprep.subr.bf16.mxu0 0
        %504 = vmatpush1.bf16.msra.mxu0 0
        %505 = vmatprep.mubr.bf16.mxu0 0
        %506 = vmatmul.mubr.bf16.gmra.mrb[0].mxu0 %v401
        %v507 = vpop.f32.mrb[0].mxu0
        %v508 = vadd.f32 %v423, %v507
        %v509 = vpop.f32.mrb[0].mxu0
        %v510 = vpop.f32.mrb[0].mxu0
        %v511 = vpop.f32.mrb[0].mxu0
        %512 = vdwg.mxu0
        %v513 = vmax.f32 %v508, 0.0
        %v514 = vpack.c.bf16 %v513, %v513
        %v515 = vld [vmem:[#allocation7] sm:$0xf]
        %v516 = vld [vmem:[#allocation7 + $0x4] sm:$0xf]
        %v517 = vld [vmem:[#allocation7 + $0x8] sm:$0xf]
        %v518 = vld [vmem:[#allocation7 + $0xc] sm:$0xf]
        %v519 = vld [vmem:[#allocation7 + $0x10] sm:$0xf]
        %v520 = vld [vmem:[#allocation7 + $0x14] sm:$0xf]
        %v521 = vld [vmem:[#allocation7 + $0x18] sm:$0xf]
        %v522 = vld [vmem:[#allocation7 + $0x1c] sm:$0xf]
        %v523 = vld [vmem:[#allocation7 + $0x20] sm:$0xf]
        %v524 = vld [vmem:[#allocation7 + $0x24] sm:$0xf]
        %v525 = vld [vmem:[#allocation7 + $0x28] sm:$0xf]
        %v526 = vld [vmem:[#allocation7 + $0x2c] sm:$0xf]
        %v527 = vld [vmem:[#allocation7 + $0x30] sm:$0xf]
        %v528 = vld [vmem:[#allocation7 + $0x34] sm:$0xf]
        %v529 = vld [vmem:[#allocation7 + $0x38] sm:$0xf]
        %v530 = vld [vmem:[#allocation7 + $0x3c] sm:$0xf]
        %v531 = vld [vmem:[%s6] sm:$0x1]
        %v533 = vlaneseq
        %v534 = vshrl.u32 %v533, 7
        %v535 = vsub.s32 0, %v534
        %v536 = vrot.slane %v531, %v535
        %v554 = vunpack.c.l.b16 %v515
        %v555 = vunpack.c.l.b16 %v516
        %v556 = vunpack.c.l.b16 %v517
        %v557 = vunpack.c.l.b16 %v518
        %v558 = vunpack.c.l.b16 %v519
        %v559 = vunpack.c.l.b16 %v520
        %v560 = vunpack.c.l.b16 %v521
        %v561 = vunpack.c.l.b16 %v522
        %v562 = vunpack.c.l.b16 %v523
        %v563 = vunpack.c.l.b16 %v524
        %v564 = vunpack.c.l.b16 %v525
        %v565 = vunpack.c.l.b16 %v526
        %v566 = vunpack.c.l.b16 %v527
        %v567 = vunpack.c.l.b16 %v528
        %v568 = vunpack.c.l.b16 %v529
        %v569 = vunpack.c.l.b16 %v530
        %v570 = vpack.c.b16 %v555, %v554
        %v571 = vpack.c.b16 %v557, %v556
        %v572 = vpack.c.b16 %v559, %v558
        %v573 = vpack.c.b16 %v561, %v560
        %v574 = vpack.c.b16 %v563, %v562
        %v575 = vpack.c.b16 %v565, %v564
        %v576 = vpack.c.b16 %v567, %v566
        %v577 = vpack.c.b16 %v569, %v568
        %586 = vmatprep.subr.bf16.mxu0 0
        %587 = vmatpush1.bf16.msra.mxu0 %v570
        %588 = vmatprep.subr.bf16.mxu0 0
        %589 = vmatpush1.bf16.msra.mxu0 %v571
        %590 = vmatprep.subr.bf16.mxu0 0
        %591 = vmatpush1.bf16.msra.mxu0 %v572
        %592 = vmatprep.subr.bf16.mxu0 0
        %593 = vmatpush1.bf16.msra.mxu0 %v573
        %594 = vmatprep.subr.bf16.mxu0 0
        %595 = vmatpush1.bf16.msra.mxu0 %v574
        %596 = vmatprep.subr.bf16.mxu0 0
        %597 = vmatpush1.bf16.msra.mxu0 %v575
        %598 = vmatprep.subr.bf16.mxu0 0
        %599 = vmatpush1.bf16.msra.mxu0 %v576
        %600 = vmatprep.subr.bf16.mxu0 0
        %601 = vmatpush1.bf16.msra.mxu0 %v577
        %602 = vmatprep.subr.bf16.mxu0 0
        %603 = vmatpush1.bf16.msra.mxu0 0
        %604 = vmatprep.subr.bf16.mxu0 0
        %605 = vmatpush1.bf16.msra.mxu0 0
        %606 = vmatprep.subr.bf16.mxu0 0
        %607 = vmatpush1.bf16.msra.mxu0 0
        %608 = vmatprep.subr.bf16.mxu0 0
        %609 = vmatpush1.bf16.msra.mxu0 0
        %610 = vmatprep.subr.bf16.mxu0 0
        %611 = vmatpush1.bf16.msra.mxu0 0
        %612 = vmatprep.subr.bf16.mxu0 0
        %613 = vmatpush1.bf16.msra.mxu0 0
        %614 = vmatprep.subr.bf16.mxu0 0
        %615 = vmatpush1.bf16.msra.mxu0 0
        %616 = vmatprep.subr.bf16.mxu0 0
        %617 = vmatpush1.bf16.msra.mxu0 0
        %618 = vmatprep.mubr.bf16.mxu0 0
        %619 = vmatmul.mubr.bf16.gmra.mrb[0].mxu0 %v514
        %v620 = vpop.f32.mrb[0].mxu0
        %v621 = vadd.f32 %v536, %v620
        %v622 = vpop.f32.mrb[0].mxu0
        %v623 = vpop.f32.mrb[0].mxu0
        %v624 = vpop.f32.mrb[0].mxu0
        %625 = vdwg.mxu0
        %v626 = vmax.f32 %v621, 0.0
        %627 = vst [vmem:[%s337] sm:$0xff] %v626
        %p628 = scmp.lt.s32.totalorder %s23, 1
        %s629 = scalar_select %p628, %s23, 1
        %s630 = smul.addr %s629, 8
        %s631 = scalar_lea.vmem %s7, %s630
        // Predicated region
        $region65: #{_simp_ann_forward_padded.1} parent=47 // pred_check
          %p632 = pneg %p193
        $region66: #{_simp_ann_forward_padded.1} parent=47 // pred_check_branch
          %634 = sbr.rel (%p632) target = $region68
        $region67: #{_simp_ann_forward_padded.1} parent=47 // pred_region
          _
        $region68: #{_simp_ann_forward_padded.1} parent=47 // pred_fallthru
          _
      $region48: #{_simp_ann_forward_padded.1} parent=5 // pred_fallthru
        _
      %p635 = scmp.le.s32.totalorder 2, %s18
      // Predicated region
      $region69: #{_simp_ann_forward_padded.1} parent=5 // pred_check
        %p636 = pneg %p635
      $region70: #{_simp_ann_forward_padded.1} parent=5 // pred_check_branch
        %638 = sbr.rel (%p636) target = $region72
      $region71: #{_simp_ann_forward_padded.1} parent=5 // pred_region
        %s639 = ssub.s32 %s18, 2
        // Predicated region
        $region73: #{_simp_ann_forward_padded.1} parent=71 // pred_check
          %p640 = pneg %p199
        $region74: #{_simp_ann_forward_padded.1} parent=71 // pred_check_branch
          %642 = sbr.rel (%p640) target = $region76
        $region75: #{_simp_ann_forward_padded.1} parent=71 // pred_region
          %p643 = scmp.lt.s32.totalorder %s24, 1
          %s644 = scalar_select %p643, %s24, 1
          %s645 = smul.addr %s644, 8
          %s646 = scalar_lea.vmem %s7, %s645
        $region76: #{_simp_ann_forward_padded.1} parent=71 // pred_fallthru
          _
      $region72: #{_simp_ann_forward_padded.1} parent=5 // pred_fallthru
        _
    $region6: #{_simp_ann_forward_padded.1} parent=1 // loop_footer
      %s22 = sadd.s32 1, %s18
    $region7: #{_simp_ann_forward_padded.1} parent=1 // loop_footer_branch
      %17 = sbr.rel target = $region3
    $region8: #{_simp_ann_forward_padded.1} parent=1 // loop_exit
      _
    %647 = vsyncpa [#allocation3], 1
    %s648 = scalar_lea.sflag [#allocation3], 1
    %649 = vsyncpa %s648, 1
    %650 = vsyncpa [#allocation5], 1
    %651 = vsyncpa [#allocation8], 1

</llo_original>
